<compile_context>
chip_gen: v7x
topology: tpu7x:2x2x1
jax: 0.10.0
libtpu: 0.0.40
codegen_flags: <defaults>
</compile_context>

<pallas_src>
import jax
import jax.numpy as jnp
from jax.experimental import pallas as pl
from jax.experimental.pallas import tpu as pltpu


def _linear_sigmoid_kernel_bd(x_ref, w_ref, b_ref, o_ref):
    # x: (TB, D) f32 VMEM, w: (1, D) f32 VMEM, b: (1,) f32 SMEM, o: (1, TB) f32
    prod = x_ref[...] * w_ref[...]                  # VPU broadcast multiply (no MXU)
    y = jnp.sum(prod, axis=-1) + b_ref[0]           # XLU cross-lane reduce -> (TB,)
    # exp on the EUP; exact divide keeps full f32 accuracy for the reference check.
    o_ref[...] = (1.0 / (1.0 + jnp.exp(-y)))[None, :].astype(o_ref.dtype)


def _linear_sigmoid_kernel_db(xt_ref, w_ref, b_ref, o_ref):
    # xt: (D, TB) f32 VMEM (batch on lanes), w: (D, 1), b: (1,) SMEM, o: (1, TB)
    prod = xt_ref[...] * w_ref[...]                 # VPU broadcast multiply
    y = jnp.sum(prod, axis=0, keepdims=True) + b_ref[0]   # sublane reduce -> (1, TB)
    o_ref[...] = (1.0 / (1.0 + jnp.exp(-y))).astype(o_ref.dtype)


def _round_up(v, m):
    return ((v + m - 1) // m) * m


def mock_model_forward(x, w, b, *, block_b=8192, x_is_transposed=False,
                       xla_fallback_max_batch=0, vmem_limit_bytes=None):
    """sigmoid(x @ w + b) as a single streaming Pallas TPU kernel.

    x: (B, D) float32, or (D, B) if x_is_transposed (preferred producer layout).
    w: (D, 1) float32  (PyTorch nn.Linear weight of shape (1, D), transposed).
    b: (1,) or (1, 1) float32.
    returns: (B, 1) float32.
    """
    if x_is_transposed:
        D, B = x.shape
    else:
        B, D = x.shape

    if x.dtype != jnp.float32:
        x = x.astype(jnp.float32)
    w_flat = jnp.reshape(w, (D,)).astype(jnp.float32)
    b_vec = jnp.reshape(b, (1,)).astype(jnp.float32)

    if B <= xla_fallback_max_batch:
        # Tiny problems: pallas_call + grid-step overhead exceeds the work.
        # Disabled by default (0) so tests always exercise the kernel.
        xm = x.T if x_is_transposed else x
        return jax.nn.sigmoid(xm @ w_flat[:, None] + b_vec[0])

    if B <= block_b:
        # Single full-array block (exempt from the (8, 128) divisibility rule).
        TB = B
        num_steps = 1
    else:
        # Streaming tiles: TB multiple of 128 (lane-aligned output row), capped
        # at block_b for VMEM, shrunk so v7x's two TCs get >= 8 grid steps.
        TB = min(block_b, max(128, _round_up(pl.cdiv(B, 8), 128)))
        num_steps = pl.cdiv(B, TB)        # no padding; last block is partial

    if x_is_transposed:
        kernel = _linear_sigmoid_kernel_db
        w_arg = w_flat.reshape(D, 1)                           # broadcast down lanes
        x_spec = pl.BlockSpec((D, TB), lambda i: (0, i))
        w_spec = pl.BlockSpec((D, 1), lambda i: (0, 0))
    else:
        kernel = _linear_sigmoid_kernel_bd
        w_arg = w_flat.reshape(1, D)                           # broadcast down sublanes
        x_spec = pl.BlockSpec((TB, D), lambda i: (i, 0))
        w_spec = pl.BlockSpec((1, D), lambda i: (0, 0))

    cp_kwargs = dict(dimension_semantics=("parallel",))
    if vmem_limit_bytes is not None:
        cp_kwargs["vmem_limit_bytes"] = vmem_limit_bytes

    out_row = pl.pallas_call(
        kernel,
        out_shape=jax.ShapeDtypeStruct((1, B), jnp.float32),
        grid=(num_steps,),
        in_specs=[
            x_spec,                                            # streamed x tiles
            w_spec,                                            # weight stays resident
            pl.BlockSpec(memory_space=pltpu.MemorySpace.SMEM), # bias scalar in SMEM
        ],
        out_specs=pl.BlockSpec((1, TB), lambda i: (0, i)),     # lane-dense output row
        compiler_params=pltpu.CompilerParams(**cp_kwargs),
    )(x, w_arg, b_vec)

    # Back to PyTorch's (B, 1) convention outside the kernel.
    return out_row.reshape(B, 1)


if __name__ == "__main__":
    input_size = 26
    root = jax.random.PRNGKey(0)
    kw, kb, kx1, kx2 = jax.random.split(root, 4)

    # Deterministic params mirroring nn.Linear(26, 1): uniform(+-1/sqrt(fan_in)).
    bound = 1.0 / float(input_size) ** 0.5
    w = jax.random.uniform(kw, (input_size, 1), jnp.float32, -bound, bound)
    b = jax.random.uniform(kb, (1,), jnp.float32, -bound, bound)

    def ref_fn(xx):
        return jax.nn.sigmoid(xx @ w + b[None, :])

    # 1) Small shape consistent with the module: single full-array block path.
    batch = 8
    x_small = jax.random.normal(kx1, (batch, input_size), dtype=jnp.float32)
    out_small = jax.block_until_ready(mock_model_forward(x_small, w, b))
    assert out_small.shape == (batch, 1)
    assert jnp.allclose(out_small, ref_fn(x_small), atol=1e-5, rtol=1e-5)

    # 2) Streaming path with an UNPADDED partial last block (small block_b keeps
    #    the test small; real workloads use the default 8192-row tiles).
    batch2 = 1200
    x_big = jax.random.normal(kx2, (batch2, input_size), dtype=jnp.float32)
    out_big = jax.block_until_ready(mock_model_forward(x_big, w, b, block_b=256))
    assert out_big.shape == (batch2, 1)
    assert jnp.allclose(out_big, ref_fn(x_big), atol=1e-5, rtol=1e-5)

    # 3) Producer-transposed (D, B) layout: sublane-reduce kernel, batch on lanes.
    out_t = jax.block_until_ready(
        mock_model_forward(x_big.T, w, b, block_b=256, x_is_transposed=True))
    assert out_t.shape == (batch2, 1)
    assert jnp.allclose(out_t, ref_fn(x_big), atol=1e-5, rtol=1e-5)

    print("KERNEL_OK")
</pallas_src>

<mosaic_0001>
module attributes {stable_mosaic.version = 11 : i64} {
  func.func @_linear_sigmoid_kernel_bd(%arg0: i32, %arg1: memref<8x26xf32, #tpu.memory_space<vmem>>, %arg2: memref<1x26xf32, #tpu.memory_space<vmem>>, %arg3: memref<1xf32, #tpu.memory_space<smem>>, %arg4: memref<1x8xf32, #tpu.memory_space<vmem>>) attributes {dimension_semantics = [#tpu.dimension_semantics<parallel>], iteration_bounds = array<i64: 1>, scalar_prefetch = 0 : i64, scratch_operands = 0 : i64, tpu.core_type = #tpu.core_type<tc>, window_params = [{transform_indices = @transform_0, window_bounds = array<i64: 8, 26>}, {pipeline_mode = #tpu.pipeline_mode<synchronous>, transform_indices = @transform_1, window_bounds = array<i64: 1, 26>}, {transform_indices = @transform_2, window_bounds = array<i64: 1>}, {transform_indices = @transform_3, window_bounds = array<i64: 1, 8>}]} {
    %c0 = arith.constant 0 : index
    %c0_0 = arith.constant 0 : index
    %0 = vector.load %arg1[%c0, %c0_0] : memref<8x26xf32, #tpu.memory_space<vmem>>, vector<8x26xf32>
    %c0_1 = arith.constant 0 : index
    %c0_2 = arith.constant 0 : index
    %1 = vector.load %arg2[%c0_1, %c0_2] : memref<1x26xf32, #tpu.memory_space<vmem>>, vector<1x26xf32>
    %2 = vector.broadcast %1 : vector<1x26xf32> to vector<8x26xf32>
    %3 = arith.mulf %0, %2 : vector<8x26xf32>
    %cst = arith.constant dense<0.000000e+00> : vector<8xf32>
    %4 = vector.multi_reduction <add>, %3, %cst [1] : vector<8x26xf32> to vector<8xf32>
    %c0_3 = arith.constant 0 : index
    %5 = memref.load %arg3[%c0_3] : memref<1xf32, #tpu.memory_space<smem>>
    %6 = vector.broadcast %5 : f32 to vector<8xf32>
    %7 = arith.addf %4, %6 : vector<8xf32>
    %cst_4 = arith.constant 0.000000e+00 : f32
    %8 = vector.broadcast %cst_4 : f32 to vector<8xf32>
    %9 = arith.subf %8, %7 : vector<8xf32>
    %10 = math.exp %9 : vector<8xf32>
    %cst_5 = arith.constant 1.000000e+00 : f32
    %11 = vector.broadcast %cst_5 : f32 to vector<8xf32>
    %12 = arith.addf %11, %10 : vector<8xf32>
    %cst_6 = arith.constant 1.000000e+00 : f32
    %13 = vector.broadcast %cst_6 : f32 to vector<8xf32>
    %14 = arith.divf %13, %12 : vector<8xf32>
    %15 = vector.shape_cast %14 : vector<8xf32> to vector<1x8xf32>
    %c0_7 = arith.constant 0 : index
    %c0_8 = arith.constant 0 : index
    %16 = vector.load %arg4[%c0_7, %c0_8] : memref<1x8xf32, #tpu.memory_space<vmem>>, vector<1x8xf32>
    tpu.vector_store %arg4[%c0_7, %c0_8], %15 {strides = array<i32>} : memref<1x8xf32, #tpu.memory_space<vmem>>, vector<1x8xf32>,
    return
  }
  func.func @transform_0(%arg0: i32) -> (i32, i32) {
    %c0_i32 = arith.constant 0 : i32
    %c0_i32_0 = arith.constant 0 : i32
    return %arg0, %c0_i32 : i32, i32
  }
  func.func @transform_1(%arg0: i32) -> (i32, i32) {
    %c0_i32 = arith.constant 0 : i32
    %c0_i32_0 = arith.constant 0 : i32
    %c0_i32_1 = arith.constant 0 : i32
    return %c0_i32, %c0_i32_0 : i32, i32
  }
  func.func @transform_2(%arg0: i32) -> i32 {
    %c0_i32 = arith.constant 0 : i32
    %c0_i32_0 = arith.constant 0 : i32
    return %c0_i32 : i32
  }
  func.func @transform_3(%arg0: i32) -> (i32, i32) {
    %c0_i32 = arith.constant 0 : i32
    %c0_i32_0 = arith.constant 0 : i32
    return %c0_i32, %arg0 : i32, i32
  }
}

</mosaic_0001>

<llo_original>
// kernel: tpu_custom_call.1
$region0: #{tpu_custom_call.1}
  #allocation0 [shape = 'u32[]', space=smem, size = 0x4, offset = 0x4, fixed_abs, tag = 'smem constant byte address 0x4 - core index']
  #allocation1 [shape = 'u32[144,128]{1,0:T(1,128)}', space=vmem, size = 0x12000, scoped, tag = 'internal scratch']
  #allocation2 [shape = 'f32[1]{0:T(128)S(6)}', space=smem, size = 0x200, scoped, tag = 'scoped memory for tpu_custom_call.1']
  %s0 = inlined_call_operand.hbm [shape: f32[8,26], index: 0, kind: input, shape index: {}]
  %s1 = inlined_call_operand.vmem [shape: f32[1,26], index: 1, kind: input, shape index: {}]
  %s2 = inlined_call_operand.<no memory space> [shape: f32[1], index: 2, kind: input, shape index: {}]
  %s3 = inlined_call_operand.hbm [shape: f32[1,8], index: 3, kind: output, shape index: {}]
  %s4 = sld [smem:[#allocation0]]
  $region26: #{tpu_custom_call.1} parent=0
    _
  %s6 = ssub.s32 1, %s4
  %s7 = scalar_select 0, %s6, %s4
  %8 = sst [smem:[#allocation2]] %s2
  $region1: #{tpu_custom_call.1} parent=0
    #allocation3 [shape = 'u8[4096]{0}', space=vmem, size = 0x1000, scoped, tag = 'input window, operand 0, single buffered']
    #allocation4 [shape = 's32[1]{0}', space=sflag, size = 0x4, scoped, tag = 'scoped memory for tpu_custom_call.1']
    #allocation5 [shape = 's32[1]{0}', space=sflag, size = 0x4, scoped, tag = 'scoped memory for tpu_custom_call.1']
    #allocation6 [shape = 'u8[512]{0}', space=vmem, size = 0x400, scoped, tag = 'output window, operand 0, single buffered']
    %9 = vsyncpa [#allocation4], 0
    %10 = vsyncpa [#allocation5], 0
    // Predicated region
    $region2: #{tpu_custom_call.1} parent=1 // pred_check
      _
    $region3: #{tpu_custom_call.1} parent=1 // pred_check_branch
      %12 = sbr.rel (0) target = $region5
    $region4: #{tpu_custom_call.1} parent=1 // pred_region
      %s14 = ssub.s32 128, 128
      %15 = vsyncadd [#allocation4], %s14
      %s17 = sshll.u32 [#allocation3], 4
      %s18 = int_to_ptr.vmem [resolvable:$true] %s17
      %20 = dma.hbm_to_vmem [thread:$0]  %s0, 128, %s18, [#allocation4]
    $region5: #{tpu_custom_call.1} parent=1 // pred_fallthru
      _
    // Predicated region
    $region6: #{tpu_custom_call.1} parent=1 // pred_check
      _
    $region7: #{tpu_custom_call.1} parent=1 // pred_check_branch
      %22 = sbr.rel (0) target = $region9
    $region8: #{tpu_custom_call.1} parent=1 // pred_region
      _
    $region9: #{tpu_custom_call.1} parent=1 // pred_fallthru
      _
    // Predicated region
    $region10: #{tpu_custom_call.1} parent=1 // pred_check
      _
    $region11: #{tpu_custom_call.1} parent=1 // pred_check_branch
      %24 = sbr.rel (0) target = $region13
    $region12: #{tpu_custom_call.1} parent=1 // pred_region
      _
    $region13: #{tpu_custom_call.1} parent=1 // pred_fallthru
      _
    // Predicated region
    $region14: #{tpu_custom_call.1} parent=1 // pred_check
      _
    $region15: #{tpu_custom_call.1} parent=1 // pred_check_branch
      %26 = sbr.rel (0) target = $region17
    $region16: #{tpu_custom_call.1} parent=1 // pred_region
      %27 = dma.done [#allocation4], 128
    $region17: #{tpu_custom_call.1} parent=1 // pred_fallthru
      _
    %v28 = vld [vmem:[#allocation3] sm:$0xff]
    %v29 = vld [vmem:[%s1] sm:$0x1]
    %v31 = vlaneseq
    %v32 = vshrl.u32 %v31, 7
    %v33 = vsub.s32 0, %v32
    %v34 = vrot.slane %v29, %v33
    %v36 = vmul.f32 %v28, %v34
    %vm37 = vcmask 211968
    %v38 = vsel %vm37, %v36, 0.0
    %39 = vadd.xlane.f32.xlu0 %v38
    %v40 = vpop.xlane.xlu0 %39
    %s41 = sld [smem:[#allocation2]]
    %v42 = vstv %s41
    %v43 = vadd.f32 %v40, %v42
    %v44 = vsub.f32 0.0, %v43
    %v45 = vmul.f32 %v44, 1.442695
    %v46 = vpow.pop %v45
    %v47 = vadd.f32 %v46, 1.0
    %v48 = vrcp.pop %v47
    %v49 = vmul.f32 1.0, %v48
    %v51 = vlaneseq
    %v52 = vand.u32 %v51, 127
    %v53 = vlaneseq
    %v54 = vshrl.u32 %v53, 7
    %v55 = vsub.s32 %v52, %v54
    %v56 = vrot.slane %v49, %v55
    %vm58 = vcmask 57344
    %59 = vst.msk [vmem:[#allocation6] sm:$0x1] %vm58, %v56
    // Predicated region
    $region18: #{tpu_custom_call.1} parent=1 // pred_check
      _
    $region19: #{tpu_custom_call.1} parent=1 // pred_check_branch
      %61 = sbr.rel (0) target = $region21
    $region20: #{tpu_custom_call.1} parent=1 // pred_region
      %s63 = ssub.s32 16, 16
      %64 = vsyncadd [#allocation5], %s63
      %s66 = sshll.u32 [#allocation6], 4
      %s67 = int_to_ptr.vmem [resolvable:$true] %s66
      %69 = dma.vmem_to_hbm [thread:$0]  %s67, 16, %s3, [#allocation5]
    $region21: #{tpu_custom_call.1} parent=1 // pred_fallthru
      _
    // Predicated region
    $region22: #{tpu_custom_call.1} parent=1 // pred_check
      _
    $region23: #{tpu_custom_call.1} parent=1 // pred_check_branch
      %71 = sbr.rel (0) target = $region25
    $region24: #{tpu_custom_call.1} parent=1 // pred_region
      %72 = dma.done [#allocation5], 16
    $region25: #{tpu_custom_call.1} parent=1 // pred_fallthru
      _
    %73 = vsyncpa [#allocation4], 1
    %74 = vsyncpa [#allocation5], 1

</llo_original>
